<compile_context>
chip_gen: v6e
topology: v6e:2x2x1
jax: 0.10.0
libtpu: 0.0.40
codegen_flags: <defaults>
</compile_context>

<pallas_src>
import math
from functools import partial

import jax
import jax.numpy as jnp
from jax.experimental import pallas as pl
from jax.experimental.pallas import tpu as pltpu


def make_positional_encoding(d_model: int, max_len: int = 50000,
                             dtype=jnp.float32) -> jnp.ndarray:
    """pe of shape (max_len, d_model), matching the PyTorch buffer pe[0].

    Pre-cast to the activation dtype at setup so the kernel never promotes.
    """
    if d_model % 2 != 0:
        raise ValueError("d_model must be even (same assumption as the PyTorch impl).")
    position = jnp.arange(max_len, dtype=jnp.float32)[:, None]            # (L, 1)
    div_term = jnp.exp(
        jnp.arange(0, d_model, 2, dtype=jnp.float32)
        * (-math.log(10000.0) / d_model)
    )                                                                     # (D/2,)
    angles = position * div_term                                          # (L, D/2)
    # interleave: pe[:, 0::2] = sin, pe[:, 1::2] = cos
    pe = jnp.stack([jnp.sin(angles), jnp.cos(angles)], axis=-1).reshape(max_len, d_model)
    return pe.astype(dtype)


def _pe_add_kernel(x_ref, pe_ref, o_ref):
    # x_ref/o_ref: (TB, TF); pe_ref: (1, TF) broadcast over the batch sublanes.
    # Single vld + vadd + vst per output vreg; nothing here is the bottleneck.
    o_ref[...] = x_ref[...] + pe_ref[...]


# Target for the double-buffered block working set (sublane-padded accounting).
_VMEM_BUDGET_BYTES = 12 * 1024 * 1024
# Scoped VMEM we request from Mosaic: above v5e's 16 MiB default, below v7x's
# 64 MiB physical (= its 32 MiB scoped default), leaving internal-scratch room.
_VMEM_LIMIT_BYTES = 32 * 1024 * 1024
# Minimum number of feature tiles for large arrays (DMA overlap / 2-TC sharding).
_MIN_FEATURE_TILES = 4


def _sublane_rows(dtype) -> int:
    """Rows per VMEM tile: (8,128) f32, (16,128) bf16/f16, (32,128) int8/fp8."""
    return {4: 8, 2: 16, 1: 32}.get(jnp.dtype(dtype).itemsize, 8)


@partial(jax.jit, donate_argnums=0)
def positional_encoding_forward(x: jnp.ndarray, pe: jnp.ndarray) -> jnp.ndarray:
    """x: (B, N, D); pe: (max_len, D). Returns x + pe[None, :N, :]."""
    B, N, D = x.shape
    max_len = pe.shape[0]
    if N > max_len:
        raise ValueError(f"sequence length {N} exceeds positional table max_len {max_len}")

    F = N * D
    itemsize = jnp.dtype(x.dtype).itemsize
    sublane = _sublane_rows(x.dtype)

    # ---- Tile sizing (sublane-padded footprint) --------------------------------
    TB = B if B <= 64 else 64
    tb_pad = ((TB + sublane - 1) // sublane) * sublane   # padded rows of the x/out blocks
    pe_pad = sublane                                     # the (1, TF) pe block pads to a full tile
    # per-step bytes ~= 2 bufs * itemsize * TF * (x rows + out rows + pe rows), all padded
    TF = _VMEM_BUDGET_BYTES // (2 * itemsize * (2 * tb_pad + pe_pad))
    if TF >= F:
        if F * itemsize > (1 << 20) and F >= _MIN_FEATURE_TILES * 128:
            # Don't collapse to a single grid step: keep >= ~4 feature tiles so
            # read+write DMAs overlap and v7x can shard the axis across both TCs.
            TF = max(128, ((F // _MIN_FEATURE_TILES) // 128) * 128)
        else:
            TF = F                                   # single tile == full dim -> always legal
    else:
        TF = max(128, (TF // 128) * 128)             # lane-dense, 128-aligned tile

    # ---- Operand layout ----------------------------------------------------------
    x2 = x.reshape(B, F)                             # free row-major bitcast
    pe_flat = pe.reshape(1, max_len * D)             # full table; tiles indexed by BlockSpec

    if pe.dtype != x.dtype:
        # Fallback: cast ONLY the N rows actually used (never the full 50k-row
        # table inside jit). Best practice is still to pre-cast at setup.
        pe2 = pe_flat[:, :F].astype(x.dtype)
    elif TF == F and F % 128 != 0:
        # A non-128-multiple block width must equal the array's full last dim,
        # so materialize the (small) slice just for this corner case.
        pe2 = pe_flat[:, :F]
    else:
        pe2 = pe_flat

    n_f = pl.cdiv(F, TF)
    n_b = pl.cdiv(B, TB)

    # Grid order: feature tile OUTER, batch tile INNER -> the pe block index is
    # constant across the inner loop, so Pallas does not re-fetch the pe tile.
    out2 = pl.pallas_call(
        _pe_add_kernel,
        out_shape=jax.ShapeDtypeStruct((B, F), x.dtype),
        grid_spec=pltpu.PrefetchScalarGridSpec(
            num_scalar_prefetch=0,
            grid=(n_f, n_b),
            in_specs=[
                pl.BlockSpec((TB, TF), lambda f, b: (b, f)),   # x
                pl.BlockSpec((1, TF), lambda f, b: (0, f)),    # pe (reused over batch)
            ],
            out_specs=pl.BlockSpec((TB, TF), lambda f, b: (b, f)),
        ),
        # Output reuses x's HBM buffer; combined with jit-level donation this
        # removes the second (B, N*D) allocation (block shapes/index maps match).
        input_output_aliases={0: 0},
        cost_estimate=pl.CostEstimate(
            flops=B * F,                                   # one add per element
            transcendentals=0,
            bytes_accessed=(2 * B + 1) * F * itemsize,     # read x + pe, write out
        ),
        compiler_params=pltpu.CompilerParams(
            dimension_semantics=("parallel", "parallel"),
            vmem_limit_bytes=_VMEM_LIMIT_BYTES,
        ),
    )(x2, pe2)

    return out2.reshape(B, N, D)


if __name__ == "__main__":
    B, N, D = 2, 8, 32          # batch=2, seq=8, d_model=32
    MAX_LEN = 50000

    key = jax.random.PRNGKey(0)
    x = jax.random.normal(key, (B, N, D), dtype=jnp.float32)
    pe = make_positional_encoding(D, MAX_LEN, dtype=x.dtype)

    # Reference is computed and materialized BEFORE the kernel call because x
    # is donated to positional_encoding_forward (its buffer is invalid after).
    ref = jax.block_until_ready(x + pe[None, :N, :])

    out = positional_encoding_forward(x, pe)
    out = jax.block_until_ready(out)

    assert out.shape == (B, N, D)
    assert jnp.allclose(out, ref, atol=1e-6), "mismatch vs reference"

    print("KERNEL_OK")
</pallas_src>

<mosaic_0001>
module attributes {stable_mosaic.version = 11 : i64} {
  func.func @_pe_add_kernel(%arg0: i32, %arg1: i32, %arg2: memref<2x256xf32, #tpu.memory_space<vmem>>, %arg3: memref<1x256xf32, #tpu.memory_space<vmem>>, %arg4: memref<2x256xf32, #tpu.memory_space<vmem>>) attributes {dimension_semantics = [#tpu.dimension_semantics<parallel>, #tpu.dimension_semantics<parallel>], iteration_bounds = array<i64: 1, 1>, scalar_prefetch = 0 : i64, scratch_operands = 0 : i64, tpu.core_type = #tpu.core_type<tc>, window_params = [{transform_indices = @transform_0, window_bounds = array<i64: 2, 256>}, {transform_indices = @transform_1, window_bounds = array<i64: 1, 256>}, {transform_indices = @transform_2, window_bounds = array<i64: 2, 256>}]} {
    %c0 = arith.constant 0 : index
    %c0_0 = arith.constant 0 : index
    %0 = vector.load %arg2[%c0, %c0_0] : memref<2x256xf32, #tpu.memory_space<vmem>>, vector<2x256xf32>
    %c0_1 = arith.constant 0 : index
    %c0_2 = arith.constant 0 : index
    %1 = vector.load %arg3[%c0_1, %c0_2] : memref<1x256xf32, #tpu.memory_space<vmem>>, vector<1x256xf32>
    %2 = vector.broadcast %1 : vector<1x256xf32> to vector<2x256xf32>
    %3 = arith.addf %0, %2 : vector<2x256xf32>
    %c0_3 = arith.constant 0 : index
    %c0_4 = arith.constant 0 : index
    %4 = vector.load %arg4[%c0_3, %c0_4] : memref<2x256xf32, #tpu.memory_space<vmem>>, vector<2x256xf32>
    tpu.vector_store %arg4[%c0_3, %c0_4], %3 {strides = array<i32>} : memref<2x256xf32, #tpu.memory_space<vmem>>, vector<2x256xf32>,
    return
  }
  func.func @transform_0(%arg0: i32, %arg1: i32) -> (i32, i32) {
    %c0_i32 = arith.constant 0 : i32
    return %arg1, %arg0 : i32, i32
  }
  func.func @transform_1(%arg0: i32, %arg1: i32) -> (i32, i32) {
    %c0_i32 = arith.constant 0 : i32
    %c0_i32_0 = arith.constant 0 : i32
    return %c0_i32, %arg0 : i32, i32
  }
  func.func @transform_2(%arg0: i32, %arg1: i32) -> (i32, i32) {
    %c0_i32 = arith.constant 0 : i32
    return %arg1, %arg0 : i32, i32
  }
}

</mosaic_0001>

<llo_original>
// kernel: positional_encoding_forward.1
$region0: #{positional_encoding_forward.1}
  #allocation0 [shape = 'u32[]', space=smem, size = 0x4, offset = 0x4, fixed_abs, tag = 'smem constant byte address 0x4 - core index']
  #allocation1 [shape = 'u32[144,128]{1,0:T(1,128)}', space=vmem, size = 0x12000, scoped, tag = 'internal scratch']
  %s0 = inlined_call_operand.vmem [shape: f32[2,256], index: 0, kind: input, shape index: {}, may-alias: {0,2}]
  %s1 = inlined_call_operand.vmem [shape: f32[1,1600000], index: 1, kind: input, shape index: {}]
  %s2 = inlined_call_operand.vmem [shape: f32[2,256], index: 2, kind: output, shape index: {}, may-alias: {0,2}]
  %s3 = sld [smem:[#allocation0]]
  $region18: #{positional_encoding_forward.1} parent=0
    _
  %s5 = ssub.s32 1, %s3
  %s6 = scalar_select 0, %s5, %s3
  // Predicated region
  $region2: #{positional_encoding_forward.1} parent=0 // pred_check
    _
  $region3: #{positional_encoding_forward.1} parent=0 // pred_check_branch
    %8 = sbr.rel (0) target = $region5
  $region4: #{positional_encoding_forward.1} parent=0 // pred_region
    _
  $region5: #{positional_encoding_forward.1} parent=0 // pred_fallthru
    _
  // Predicated region
  $region6: #{positional_encoding_forward.1} parent=0 // pred_check
    _
  $region7: #{positional_encoding_forward.1} parent=0 // pred_check_branch
    %10 = sbr.rel (0) target = $region9
  $region8: #{positional_encoding_forward.1} parent=0 // pred_region
    _
  $region9: #{positional_encoding_forward.1} parent=0 // pred_fallthru
    _
  %v11 = vld [vmem:[%s0] sm:$0xf]
  %v12 = vld [vmem:[%s1] sm:$0x3]
  %v14 = vlaneseq
  %v15 = vshrl.u32 %v14, 7
  %v16 = vsub.s32 0, %v15
  %v17 = vrot.slane %v12, %v16
  %v18 = vlaneseq
  %v19 = vshrl.u32 %v18, 7
  %v20 = vsub.s32 1, %v19
  %v21 = vrot.slane %v12, %v20
  %v22 = vcombine.low %v17, %v21
  %v24 = vunpack.c.l.s4 1983009808
  %v25 = vunpack.c.0.s8 %v24
  %v26 = vlaneseq
  %v27 = vshrl.u32 %v26, 7
  %v28 = vsub.s32 %v25, %v27
  %v29 = vrot.slane %v22, %v28
  %v31 = vadd.f32 %v11, %v29
  %32 = vst [vmem:[%s2] sm:$0xf] %v31
  // Predicated region
  $region10: #{positional_encoding_forward.1} parent=0 // pred_check
    _
  $region11: #{positional_encoding_forward.1} parent=0 // pred_check_branch
    %34 = sbr.rel (0) target = $region13
  $region12: #{positional_encoding_forward.1} parent=0 // pred_region
    _
  $region13: #{positional_encoding_forward.1} parent=0 // pred_fallthru
    _
  // Predicated region
  $region14: #{positional_encoding_forward.1} parent=0 // pred_check
    _
  $region15: #{positional_encoding_forward.1} parent=0 // pred_check_branch
    %36 = sbr.rel (0) target = $region17
  $region16: #{positional_encoding_forward.1} parent=0 // pred_region
    _
  $region17: #{positional_encoding_forward.1} parent=0 // pred_fallthru
    _

</llo_original>
